<compile_context>
chip_gen: v7x
topology: tpu7x:2x2x1
jax: 0.10.0
libtpu: 0.0.40
codegen_flags: <defaults>
</compile_context>

<pallas_src>
import jax
import jax.numpy as jnp
from jax.experimental import pallas as pl
from jax.experimental.pallas import tpu as pltpu

# hyper-parameters from PerceptualVAELoss.__init__ defaults
SPARSITY_TARGET = 0.05
SPARSITY_WEIGHT = 0.1
KL_WEIGHT = 0.01
SPECTRAL_WEIGHT = 0.5
PERCEPTUAL_WEIGHT = 1.0
WAVEFORM_WEIGHT = 0.0
EPS = 1e-8


def _pick_tile_and_vmem(B, F, itemsize):
    """Generation-dependent feature-tile size and explicit VMEM limit."""
    try:
        info = pltpu.get_tpu_info()
        vmem_cap = int(getattr(info, "vmem_capacity_bytes", 64 * 1024 * 1024))
    except Exception:
        vmem_cap = 64 * 1024 * 1024  # conservative (v7x-sized) fallback
    # ~1/32 of VMEM per input block => 2 inputs x 2 pipeline buffers ~ vmem/8,
    # leaving plenty of room for the two f32 accumulators even for f32 inputs.
    per_block_budget = max(vmem_cap // 32, 512 * 1024)
    tile = per_block_budget // max(B * itemsize, 1)
    tile = max(128, (tile // 128) * 128)          # lane-aligned
    tile_f = F if F <= tile else tile             # whole axis if it already fits
    # Pipeline buffers (2 inputs x 2 bufs) + 2 f32 accumulators + headroom.
    needed = 4 * B * tile_f * itemsize + 2 * B * tile_f * 4 + (1 << 20)
    vmem_limit = int(min(vmem_cap // 2, max(2 * needed, 16 * 1024 * 1024)))
    return tile_f, vmem_limit


def _make_loss_kernel(B, F, TILE_F, D):
    n_x = B * F
    ragged = (F % TILE_F) != 0

    def kernel(xo_ref, xr_ref, z_ref, mu_ref, lv_ref, out_ref, acc_r, acc_s):
        i = pl.program_id(0)
        nt = pl.num_programs(0)

        @pl.when(i == 0)
        def _init():
            acc_r[...] = jnp.zeros_like(acc_r)
            acc_s[...] = jnp.zeros_like(acc_s)

        # Stream one (B, TILE_F) tile; cast to f32 inside the kernel only.
        xo = xo_ref[...].astype(jnp.float32)
        xr = xr_ref[...].astype(jnp.float32)

        if ragged:
            # Mask out-of-range lanes of the last (partial) feature tile.
            col = jax.lax.broadcasted_iota(jnp.int32, (B, TILE_F), 1) + i * TILE_F
            valid = col < F
            xo = jnp.where(valid, xo, 0.0)
            xr = jnp.where(valid, xr, 0.0)

        diff = xo - xr
        sq = diff * diff                              # masked lanes contribute 0
        emph = jnp.sqrt(jnp.abs(xo) + EPS)            # EUP; hidden behind DMA

        # Element-wise accumulation on the VPU; single XLU reduce in epilogue.
        acc_r[...] += sq
        acc_s[...] += emph * sq

        @pl.when(i == nt - 1)
        def _finalize():
            recon_loss = jnp.sum(acc_r[...]) / jnp.float32(n_x)
            spec_loss = jnp.sum(acc_s[...]) / jnp.float32(n_x)

            mu = mu_ref[...].astype(jnp.float32)
            lv = lv_ref[...].astype(jnp.float32)
            kl_loss = (-0.5 * jnp.sum(1.0 + lv - mu * mu - jnp.exp(lv))
                       / jnp.float32(B))

            z = z_ref[...].astype(jnp.float32)
            # NOTE: assumes mean(|z|) in (0,1) (as the PyTorch module does);
            # values outside that range would make log(1 - avg) ill-defined.
            avg_act = jnp.mean(jnp.abs(z), axis=0, keepdims=True)   # (1, D)
            t = jnp.float32(SPARSITY_TARGET)
            sparsity_loss = jnp.sum(
                t * jnp.log((t + EPS) / (avg_act + EPS))
                + (1.0 - t) * jnp.log((1.0 - t + EPS) / (1.0 - avg_act + EPS)))

            wave_loss = jnp.float32(0.0)      # waveform_weight defaults to 0.0
            percep_loss = jnp.float32(0.0)    # VGGish unavailable -> fallback 0

            total = (recon_loss
                     + SPECTRAL_WEIGHT * spec_loss
                     + KL_WEIGHT * kl_loss
                     + SPARSITY_WEIGHT * sparsity_loss
                     + WAVEFORM_WEIGHT * wave_loss
                     + PERCEPTUAL_WEIGHT * percep_loss)

            out_ref[0] = total
            out_ref[1] = recon_loss
            out_ref[2] = spec_loss
            out_ref[3] = kl_loss
            out_ref[4] = sparsity_loss
            out_ref[5] = wave_loss
            out_ref[6] = percep_loss
            out_ref[7] = jnp.float32(0.0)     # explicit pad, never stale

    return kernel


@jax.jit
def _perceptual_vae_loss_impl(xo, xr, z, mu, lv):
    B, F = xo.shape
    D = z.shape[1]
    itemsize = jnp.dtype(xo.dtype).itemsize
    TILE_F, vmem_limit = _pick_tile_and_vmem(B, F, itemsize)
    num_tiles = pl.cdiv(F, TILE_F)

    kernel = _make_loss_kernel(B, F, TILE_F, D)

    cost = pl.CostEstimate(
        flops=int(8 * B * F + 10 * B * D),
        transcendentals=int(B * F + 4 * B * D),
        bytes_accessed=int(B * F * (jnp.dtype(xo.dtype).itemsize
                                    + jnp.dtype(xr.dtype).itemsize)
                           + 3 * B * D * 4 + 8 * 4),
    )

    out = pl.pallas_call(
        kernel,
        out_shape=jax.ShapeDtypeStruct((8,), jnp.float32),
        grid_spec=pltpu.PrefetchScalarGridSpec(
            num_scalar_prefetch=0,
            grid=(num_tiles,),
            in_specs=[
                pl.BlockSpec((B, TILE_F), lambda i: (0, i)),   # x_orig tiles
                pl.BlockSpec((B, TILE_F), lambda i: (0, i)),   # x_recon tiles
                pl.BlockSpec((B, D), lambda i: (0, 0)),        # z (resident)
                pl.BlockSpec((B, D), lambda i: (0, 0)),        # mu (resident)
                pl.BlockSpec((B, D), lambda i: (0, 0)),        # log_var
            ],
            out_specs=pl.BlockSpec(memory_space=pltpu.MemorySpace.SMEM),
            scratch_shapes=[
                pltpu.VMEM((B, TILE_F), jnp.float32),          # recon partials
                pltpu.VMEM((B, TILE_F), jnp.float32),          # spectral partials
            ],
        ),
        compiler_params=pltpu.CompilerParams(
            dimension_semantics=("arbitrary",),
            vmem_limit_bytes=vmem_limit,
        ),
        cost_estimate=cost,
    )(xo, xr, z, mu, lv)

    total = out[0]
    losses = {
        "total": out[0],
        "recon": out[1],
        "spectral": out[2],
        "kl": out[3],
        "sparsity": out[4],
        "waveform": out[5],
        "perceptual": out[6],
    }
    return total, losses


def perceptual_vae_loss(x_orig, x_recon, z, mu, log_var,
                        waveform_orig=None, waveform_recon=None):
    """JAX/Pallas equivalent of PerceptualVAELoss.forward (default hyper-params).

    Returns (total_loss, losses_dict) where all values are DEVICE scalars — no
    blocking host syncs are performed here.
    """
    b = x_orig.shape[0]
    xo = x_orig.reshape(b, -1)              # native dtype; cast happens in-kernel
    xr = x_recon.reshape(b, -1)
    return _perceptual_vae_loss_impl(xo, xr, z, mu, log_var)


if __name__ == "__main__":
    key = jax.random.PRNGKey(0)
    k1, k2, k3, k4, k5 = jax.random.split(key, 5)

    B, C, H, W = 2, 4, 16, 16      # NCHW spectrogram-like input
    D = 32                         # latent dimension

    x_orig = jax.random.normal(k1, (B, C, H, W), dtype=jnp.float32)
    x_recon = x_orig + 0.1 * jax.random.normal(k2, (B, C, H, W), dtype=jnp.float32)
    # latent activations in (0, 1) so the Bernoulli-KL sparsity term is well defined
    z = jax.random.uniform(k3, (B, D), dtype=jnp.float32, minval=0.01, maxval=0.9)
    mu = 0.1 * jax.random.normal(k4, (B, D), dtype=jnp.float32)
    log_var = 0.1 * jax.random.normal(k5, (B, D), dtype=jnp.float32)

    total_loss, loss_dict = perceptual_vae_loss(x_orig, x_recon, z, mu, log_var)
    jax.block_until_ready(total_loss)
    print("KERNEL_OK")
</pallas_src>

<mosaic_0001>
module attributes {stable_mosaic.version = 11 : i64} {
  func.func @kernel(%arg0: i32, %arg1: memref<2x1024xf32, #tpu.memory_space<vmem>>, %arg2: memref<2x1024xf32, #tpu.memory_space<vmem>>, %arg3: memref<2x32xf32, #tpu.memory_space<vmem>>, %arg4: memref<2x32xf32, #tpu.memory_space<vmem>>, %arg5: memref<2x32xf32, #tpu.memory_space<vmem>>, %arg6: memref<8xf32, #tpu.memory_space<smem>>, %arg7: memref<2x1024xf32, #tpu.memory_space<vmem>>, %arg8: memref<2x1024xf32, #tpu.memory_space<vmem>>) attributes {dimension_semantics = [#tpu.dimension_semantics<arbitrary>], iteration_bounds = array<i64: 1>, scalar_prefetch = 0 : i64, scratch_operands = 2 : i64, tpu.core_type = #tpu.core_type<tc>, window_params = [{transform_indices = @transform_0, window_bounds = array<i64: 2, 1024>}, {transform_indices = @transform_1, window_bounds = array<i64: 2, 1024>}, {pipeline_mode = #tpu.pipeline_mode<synchronous>, transform_indices = @transform_2, window_bounds = array<i64: 2, 32>}, {pipeline_mode = #tpu.pipeline_mode<synchronous>, transform_indices = @transform_3, window_bounds = array<i64: 2, 32>}, {pipeline_mode = #tpu.pipeline_mode<synchronous>, transform_indices = @transform_4, window_bounds = array<i64: 2, 32>}, {transform_indices = @transform_5, window_bounds = array<i64: 8>}]} {
    %c0_i32 = arith.constant 0 : i32
    %0 = arith.cmpi eq, %arg0, %c0_i32 : i32
    %1 = arith.extui %0 : i1 to i32
    %c0_i32_0 = arith.constant 0 : i32
    %2 = arith.cmpi ne, %1, %c0_i32_0 : i32
    scf.if %2 {
      %cst_14 = arith.constant 0.000000e+00 : f32
      %21 = vector.broadcast %cst_14 : f32 to vector<2x1024xf32>
      %c0_15 = arith.constant 0 : index
      %c0_16 = arith.constant 0 : index
      %22 = vector.load %arg7[%c0_15, %c0_16] : memref<2x1024xf32, #tpu.memory_space<vmem>>, vector<2x1024xf32>
      tpu.vector_store %arg7[%c0_15, %c0_16], %21 {strides = array<i32>} : memref<2x1024xf32, #tpu.memory_space<vmem>>, vector<2x1024xf32>,
      %cst_17 = arith.constant 0.000000e+00 : f32
      %23 = vector.broadcast %cst_17 : f32 to vector<2x1024xf32>
      %c0_18 = arith.constant 0 : index
      %c0_19 = arith.constant 0 : index
      %24 = vector.load %arg8[%c0_18, %c0_19] : memref<2x1024xf32, #tpu.memory_space<vmem>>, vector<2x1024xf32>
      tpu.vector_store %arg8[%c0_18, %c0_19], %23 {strides = array<i32>} : memref<2x1024xf32, #tpu.memory_space<vmem>>, vector<2x1024xf32>,
    } else {
    }
    %c0 = arith.constant 0 : index
    %c0_1 = arith.constant 0 : index
    %3 = vector.load %arg1[%c0, %c0_1] : memref<2x1024xf32, #tpu.memory_space<vmem>>, vector<2x1024xf32>
    %c0_2 = arith.constant 0 : index
    %c0_3 = arith.constant 0 : index
    %4 = vector.load %arg2[%c0_2, %c0_3] : memref<2x1024xf32, #tpu.memory_space<vmem>>, vector<2x1024xf32>
    %5 = arith.subf %3, %4 : vector<2x1024xf32>
    %6 = arith.mulf %5, %5 : vector<2x1024xf32>
    %7 = math.absf %3 : vector<2x1024xf32>
    %cst = arith.constant 9.99999993E-9 : f32
    %8 = vector.broadcast %cst : f32 to vector<2x1024xf32>
    %9 = arith.addf %7, %8 : vector<2x1024xf32>
    %10 = math.sqrt %9 : vector<2x1024xf32>
    %c0_4 = arith.constant 0 : index
    %c0_5 = arith.constant 0 : index
    %11 = vector.load %arg7[%c0_4, %c0_5] : memref<2x1024xf32, #tpu.memory_space<vmem>>, vector<2x1024xf32>
    %12 = arith.addf %11, %6 : vector<2x1024xf32>
    %c0_6 = arith.constant 0 : index
    %c0_7 = arith.constant 0 : index
    %13 = vector.load %arg7[%c0_6, %c0_7] : memref<2x1024xf32, #tpu.memory_space<vmem>>, vector<2x1024xf32>
    tpu.vector_store %arg7[%c0_6, %c0_7], %12 {strides = array<i32>} : memref<2x1024xf32, #tpu.memory_space<vmem>>, vector<2x1024xf32>,
    %c0_8 = arith.constant 0 : index
    %c0_9 = arith.constant 0 : index
    %14 = vector.load %arg8[%c0_8, %c0_9] : memref<2x1024xf32, #tpu.memory_space<vmem>>, vector<2x1024xf32>
    %15 = arith.mulf %10, %6 : vector<2x1024xf32>
    %16 = arith.addf %14, %15 : vector<2x1024xf32>
    %c0_10 = arith.constant 0 : index
    %c0_11 = arith.constant 0 : index
    %17 = vector.load %arg8[%c0_10, %c0_11] : memref<2x1024xf32, #tpu.memory_space<vmem>>, vector<2x1024xf32>
    tpu.vector_store %arg8[%c0_10, %c0_11], %16 {strides = array<i32>} : memref<2x1024xf32, #tpu.memory_space<vmem>>, vector<2x1024xf32>,
    %c0_i32_12 = arith.constant 0 : i32
    %18 = arith.cmpi eq, %arg0, %c0_i32_12 : i32
    %19 = arith.extui %18 : i1 to i32
    %c0_i32_13 = arith.constant 0 : i32
    %20 = arith.cmpi ne, %19, %c0_i32_13 : i32
    scf.if %20 {
      %c0_14 = arith.constant 0 : index
      %c0_15 = arith.constant 0 : index
      %21 = vector.load %arg7[%c0_14, %c0_15] : memref<2x1024xf32, #tpu.memory_space<vmem>>, vector<2x1024xf32>
      %22 = vector.shape_cast %21 : vector<2x1024xf32> to vector<1x2x1024xf32>
      %cst_16 = arith.constant dense<0.000000e+00> : vector<1xf32>
      %23 = vector.multi_reduction <add>, %22, %cst_16 [1, 2] : vector<1x2x1024xf32> to vector<1xf32>
      %24 = vector.shape_cast %23 : vector<1xf32> to vector<1x1x1xf32>
      %25 = vector.extract %24[0, 0, 0] : f32 from vector<1x1x1xf32>
      %cst_17 = arith.constant 2.048000e+03 : f32
      %26 = arith.divf %25, %cst_17 : f32
      %c0_18 = arith.constant 0 : index
      %c0_19 = arith.constant 0 : index
      %27 = vector.load %arg8[%c0_18, %c0_19] : memref<2x1024xf32, #tpu.memory_space<vmem>>, vector<2x1024xf32>
      %28 = vector.shape_cast %27 : vector<2x1024xf32> to vector<1x2x1024xf32>
      %cst_20 = arith.constant dense<0.000000e+00> : vector<1xf32>
      %29 = vector.multi_reduction <add>, %28, %cst_20 [1, 2] : vector<1x2x1024xf32> to vector<1xf32>
      %30 = vector.shape_cast %29 : vector<1xf32> to vector<1x1x1xf32>
      %31 = vector.extract %30[0, 0, 0] : f32 from vector<1x1x1xf32>
      %cst_21 = arith.constant 2.048000e+03 : f32
      %32 = arith.divf %31, %cst_21 : f32
      %c0_22 = arith.constant 0 : index
      %c0_23 = arith.constant 0 : index
      %33 = vector.load %arg4[%c0_22, %c0_23] : memref<2x32xf32, #tpu.memory_space<vmem>>, vector<2x32xf32>
      %c0_24 = arith.constant 0 : index
      %c0_25 = arith.constant 0 : index
      %34 = vector.load %arg5[%c0_24, %c0_25] : memref<2x32xf32, #tpu.memory_space<vmem>>, vector<2x32xf32>
      %cst_26 = arith.constant 1.000000e+00 : f32
      %35 = vector.broadcast %cst_26 : f32 to vector<2x32xf32>
      %36 = arith.addf %35, %34 : vector<2x32xf32>
      %37 = arith.mulf %33, %33 : vector<2x32xf32>
      %38 = arith.subf %36, %37 : vector<2x32xf32>
      %39 = math.exp %34 : vector<2x32xf32>
      %40 = arith.subf %38, %39 : vector<2x32xf32>
      %41 = vector.shape_cast %40 : vector<2x32xf32> to vector<1x2x32xf32>
      %cst_27 = arith.constant dense<0.000000e+00> : vector<1xf32>
      %42 = vector.multi_reduction <add>, %41, %cst_27 [1, 2] : vector<1x2x32xf32> to vector<1xf32>
      %43 = vector.shape_cast %42 : vector<1xf32> to vector<1x1x1xf32>
      %44 = vector.extract %43[0, 0, 0] : f32 from vector<1x1x1xf32>
      %cst_28 = arith.constant -5.000000e-01 : f32
      %45 = arith.mulf %cst_28, %44 : f32
      %cst_29 = arith.constant 2.000000e+00 : f32
      %46 = arith.divf %45, %cst_29 : f32
      %c0_30 = arith.constant 0 : index
      %c0_31 = arith.constant 0 : index
      %47 = vector.load %arg3[%c0_30, %c0_31] : memref<2x32xf32, #tpu.memory_space<vmem>>, vector<2x32xf32>
      %48 = math.absf %47 : vector<2x32xf32>
      %cst_32 = arith.constant dense<0.000000e+00> : vector<32xf32>
      %49 = vector.multi_reduction <add>, %48, %cst_32 [0] : vector<2x32xf32> to vector<32xf32>
      %50 = vector.shape_cast %49 : vector<32xf32> to vector<1x32xf32>
      %cst_33 = arith.constant 2.000000e+00 : f32
      %51 = vector.broadcast %cst_33 : f32 to vector<1x32xf32>
      %52 = arith.divf %50, %51 : vector<1x32xf32>
      %cst_34 = arith.constant 5.000000e-02 : f32
      %cst_35 = arith.constant 9.99999993E-9 : f32
      %53 = arith.addf %cst_34, %cst_35 : f32
      %cst_36 = arith.constant 9.99999993E-9 : f32
      %54 = vector.broadcast %cst_36 : f32 to vector<1x32xf32>
      %55 = arith.addf %52, %54 : vector<1x32xf32>
      %56 = vector.broadcast %53 : f32 to vector<1x32xf32>
      %57 = arith.divf %56, %55 : vector<1x32xf32>
      %58 = math.log %57 : vector<1x32xf32>
      %cst_37 = arith.constant 5.000000e-02 : f32
      %59 = vector.broadcast %cst_37 : f32 to vector<1x32xf32>
      %60 = arith.mulf %59, %58 : vector<1x32xf32>
      %cst_38 = arith.constant 1.000000e+00 : f32
      %cst_39 = arith.constant 5.000000e-02 : f32
      %61 = arith.subf %cst_38, %cst_39 : f32
      %cst_40 = arith.constant 1.000000e+00 : f32
      %cst_41 = arith.constant 5.000000e-02 : f32
      %62 = arith.subf %cst_40, %cst_41 : f32
      %cst_42 = arith.constant 9.99999993E-9 : f32
      %63 = arith.addf %62, %cst_42 : f32
      %cst_43 = arith.constant 1.000000e+00 : f32
      %64 = vector.broadcast %cst_43 : f32 to vector<1x32xf32>
      %65 = arith.subf %64, %52 : vector<1x32xf32>
      %cst_44 = arith.constant 9.99999993E-9 : f32
      %66 = vector.broadcast %cst_44 : f32 to vector<1x32xf32>
      %67 = arith.addf %65, %66 : vector<1x32xf32>
      %68 = vector.broadcast %63 : f32 to vector<1x32xf32>
      %69 = arith.divf %68, %67 : vector<1x32xf32>
      %70 = math.log %69 : vector<1x32xf32>
      %71 = vector.broadcast %61 : f32 to vector<1x32xf32>
      %72 = arith.mulf %71, %70 : vector<1x32xf32>
      %73 = arith.addf %60, %72 : vector<1x32xf32>
      %74 = vector.shape_cast %73 : vector<1x32xf32> to vector<1x1x32xf32>
      %cst_45 = arith.constant dense<0.000000e+00> : vector<1xf32>
      %75 = vector.multi_reduction <add>, %74, %cst_45 [1, 2] : vector<1x1x32xf32> to vector<1xf32>
      %76 = vector.shape_cast %75 : vector<1xf32> to vector<1x1x1xf32>
      %77 = vector.extract %76[0, 0, 0] : f32 from vector<1x1x1xf32>
      %cst_46 = arith.constant 5.000000e-01 : f32
      %78 = arith.mulf %cst_46, %32 : f32
      %79 = arith.addf %26, %78 : f32
      %cst_47 = arith.constant 0.00999999977 : f32
      %80 = arith.mulf %cst_47, %46 : f32
      %81 = arith.addf %79, %80 : f32
      %cst_48 = arith.constant 1.000000e-01 : f32
      %82 = arith.mulf %cst_48, %77 : f32
      %83 = arith.addf %81, %82 : f32
      %cst_49 = arith.constant 0.000000e+00 : f32
      %cst_50 = arith.constant 0.000000e+00 : f32
      %84 = arith.mulf %cst_49, %cst_50 : f32
      %85 = arith.addf %83, %84 : f32
      %cst_51 = arith.constant 1.000000e+00 : f32
      %cst_52 = arith.constant 0.000000e+00 : f32
      %86 = arith.mulf %cst_51, %cst_52 : f32
      %87 = arith.addf %85, %86 : f32
      %c0_53 = arith.constant 0 : index
      %88 = memref.load %arg6[%c0_53] : memref<8xf32, #tpu.memory_space<smem>>
      memref.store %87, %arg6[%c0_53] : memref<8xf32, #tpu.memory_space<smem>>
      %c1 = arith.constant 1 : index
      %89 = memref.load %arg6[%c1] : memref<8xf32, #tpu.memory_space<smem>>
      memref.store %26, %arg6[%c1] : memref<8xf32, #tpu.memory_space<smem>>
      %c2 = arith.constant 2 : index
      %90 = memref.load %arg6[%c2] : memref<8xf32, #tpu.memory_space<smem>>
      memref.store %32, %arg6[%c2] : memref<8xf32, #tpu.memory_space<smem>>
      %c3 = arith.constant 3 : index
      %91 = memref.load %arg6[%c3] : memref<8xf32, #tpu.memory_space<smem>>
      memref.store %46, %arg6[%c3] : memref<8xf32, #tpu.memory_space<smem>>
      %c4 = arith.constant 4 : index
      %92 = memref.load %arg6[%c4] : memref<8xf32, #tpu.memory_space<smem>>
      memref.store %77, %arg6[%c4] : memref<8xf32, #tpu.memory_space<smem>>
      %cst_54 = arith.constant 0.000000e+00 : f32
      %c5 = arith.constant 5 : index
      %93 = memref.load %arg6[%c5] : memref<8xf32, #tpu.memory_space<smem>>
      memref.store %cst_54, %arg6[%c5] : memref<8xf32, #tpu.memory_space<smem>>
      %cst_55 = arith.constant 0.000000e+00 : f32
      %c6 = arith.constant 6 : index
      %94 = memref.load %arg6[%c6] : memref<8xf32, #tpu.memory_space<smem>>
      memref.store %cst_55, %arg6[%c6] : memref<8xf32, #tpu.memory_space<smem>>
      %cst_56 = arith.constant 0.000000e+00 : f32
      %c7 = arith.constant 7 : index
      %95 = memref.load %arg6[%c7] : memref<8xf32, #tpu.memory_space<smem>>
      memref.store %cst_56, %arg6[%c7] : memref<8xf32, #tpu.memory_space<smem>>
    } else {
    }
    return
  }
  func.func @transform_0(%arg0: i32) -> (i32, i32) {
    %c0_i32 = arith.constant 0 : i32
    %c0_i32_0 = arith.constant 0 : i32
    return %c0_i32, %arg0 : i32, i32
  }
  func.func @transform_1(%arg0: i32) -> (i32, i32) {
    %c0_i32 = arith.constant 0 : i32
    %c0_i32_0 = arith.constant 0 : i32
    return %c0_i32, %arg0 : i32, i32
  }
  func.func @transform_2(%arg0: i32) -> (i32, i32) {
    %c0_i32 = arith.constant 0 : i32
    %c0_i32_0 = arith.constant 0 : i32
    %c0_i32_1 = arith.constant 0 : i32
    return %c0_i32, %c0_i32_0 : i32, i32
  }
  func.func @transform_3(%arg0: i32) -> (i32, i32) {
    %c0_i32 = arith.constant 0 : i32
    %c0_i32_0 = arith.constant 0 : i32
    %c0_i32_1 = arith.constant 0 : i32
    return %c0_i32, %c0_i32_0 : i32, i32
  }
  func.func @transform_4(%arg0: i32) -> (i32, i32) {
    %c0_i32 = arith.constant 0 : i32
    %c0_i32_0 = arith.constant 0 : i32
    %c0_i32_1 = arith.constant 0 : i32
    return %c0_i32, %c0_i32_0 : i32, i32
  }
  func.func @transform_5(%arg0: i32) -> i32 {
    %c0_i32 = arith.constant 0 : i32
    %c0_i32_0 = arith.constant 0 : i32
    return %c0_i32 : i32
  }
}

</mosaic_0001>

<llo_original>
// kernel: _perceptual_vae_loss_impl.1
$region0: #{_perceptual_vae_loss_impl.1}
  #allocation0 [shape = 'u32[]', space=smem, size = 0x4, offset = 0x4, fixed_abs, tag = 'smem constant byte address 0x4 - core index']
  #allocation1 [shape = 'u32[144,128]{1,0:T(1,128)}', space=vmem, size = 0x12000, scoped, tag = 'internal scratch']
  #allocation2 [shape = 'f32[2,1024]{1,0:T(2,128)}', space=vmem, size = 0x2000, scoped, tag = 'scratch operand']
  #allocation3 [shape = 'f32[2,1024]{1,0:T(2,128)}', space=vmem, size = 0x2000, scoped, tag = 'scratch operand']
  %s0 = inlined_call_operand.hbm [shape: f32[2,1024], index: 0, kind: input, shape index: {}]
  %s1 = inlined_call_operand.hbm [shape: f32[2,1024], index: 1, kind: input, shape index: {}]
  %s2 = inlined_call_operand.vmem [shape: f32[2,32], index: 2, kind: input, shape index: {}]
  %s3 = inlined_call_operand.vmem [shape: f32[2,32], index: 3, kind: input, shape index: {}]
  %s4 = inlined_call_operand.vmem [shape: f32[2,32], index: 4, kind: input, shape index: {}]
  %s5 = inlined_call_operand.vmem [shape: f32[8], index: 5, kind: output, shape index: {}]
  %s6 = sld [smem:[#allocation0]]
  $region46: #{_perceptual_vae_loss_impl.1} parent=0
    _
  %s8 = ssub.s32 1, %s6
  %s9 = scalar_select 0, %s8, %s6
  $region1: #{_perceptual_vae_loss_impl.1} parent=0
    #allocation4 [shape = 'u8[8192]{0}', space=vmem, size = 0x2000, scoped, tag = 'input window, operand 0, single buffered']
    #allocation5 [shape = 's32[1]{0}', space=sflag, size = 0x4, scoped, tag = 'scoped memory for _perceptual_vae_loss_impl.1']
    #allocation6 [shape = 's32[1]{0}', space=sflag, size = 0x4, scoped, tag = 'scoped memory for _perceptual_vae_loss_impl.1']
    #allocation7 [shape = 'u8[8192]{0}', space=vmem, size = 0x2000, scoped, tag = 'input window, operand 1, single buffered']
    #allocation8 [shape = 's32[1]{0}', space=sflag, size = 0x4, scoped, tag = 'scoped memory for _perceptual_vae_loss_impl.1']
    #allocation9 [shape = 'u8[512]{0}', space=smem, size = 0x200, scoped, tag = 'output window, operand 0, single buffered']
    %10 = vsyncpa [#allocation5], 0
    %11 = vsyncpa [#allocation8], 0
    %12 = vsyncpa [#allocation6], 0
    // Predicated region
    $region2: #{_perceptual_vae_loss_impl.1} parent=1 // pred_check
      _
    $region3: #{_perceptual_vae_loss_impl.1} parent=1 // pred_check_branch
      %14 = sbr.rel (0) target = $region5
    $region4: #{_perceptual_vae_loss_impl.1} parent=1 // pred_region
      %s16 = ssub.s32 256, 256
      %17 = vsyncadd [#allocation5], %s16
      %s19 = sshll.u32 [#allocation4], 4
      %s20 = int_to_ptr.vmem [resolvable:$true] %s19
      %22 = dma.hbm_to_vmem [thread:$0]  %s0, 256, %s20, [#allocation5]
    $region5: #{_perceptual_vae_loss_impl.1} parent=1 // pred_fallthru
      _
    // Predicated region
    $region6: #{_perceptual_vae_loss_impl.1} parent=1 // pred_check
      _
    $region7: #{_perceptual_vae_loss_impl.1} parent=1 // pred_check_branch
      %24 = sbr.rel (0) target = $region9
    $region8: #{_perceptual_vae_loss_impl.1} parent=1 // pred_region
      %s26 = ssub.s32 256, 256
      %27 = vsyncadd [#allocation8], %s26
      %s29 = sshll.u32 [#allocation7], 4
      %s30 = int_to_ptr.vmem [resolvable:$true] %s29
      %32 = dma.hbm_to_vmem [thread:$0]  %s1, 256, %s30, [#allocation8]
    $region9: #{_perceptual_vae_loss_impl.1} parent=1 // pred_fallthru
      _
    // Predicated region
    $region10: #{_perceptual_vae_loss_impl.1} parent=1 // pred_check
      _
    $region11: #{_perceptual_vae_loss_impl.1} parent=1 // pred_check_branch
      %34 = sbr.rel (0) target = $region13
    $region12: #{_perceptual_vae_loss_impl.1} parent=1 // pred_region
      _
    $region13: #{_perceptual_vae_loss_impl.1} parent=1 // pred_fallthru
      _
    // Predicated region
    $region14: #{_perceptual_vae_loss_impl.1} parent=1 // pred_check
      _
    $region15: #{_perceptual_vae_loss_impl.1} parent=1 // pred_check_branch
      %36 = sbr.rel (0) target = $region17
    $region16: #{_perceptual_vae_loss_impl.1} parent=1 // pred_region
      _
    $region17: #{_perceptual_vae_loss_impl.1} parent=1 // pred_fallthru
      _
    // Predicated region
    $region18: #{_perceptual_vae_loss_impl.1} parent=1 // pred_check
      _
    $region19: #{_perceptual_vae_loss_impl.1} parent=1 // pred_check_branch
      %38 = sbr.rel (0) target = $region21
    $region20: #{_perceptual_vae_loss_impl.1} parent=1 // pred_region
      _
    $region21: #{_perceptual_vae_loss_impl.1} parent=1 // pred_fallthru
      _
    // Predicated region
    $region22: #{_perceptual_vae_loss_impl.1} parent=1 // pred_check
      _
    $region23: #{_perceptual_vae_loss_impl.1} parent=1 // pred_check_branch
      %40 = sbr.rel (0) target = $region25
    $region24: #{_perceptual_vae_loss_impl.1} parent=1 // pred_region
      %41 = dma.done [#allocation5], 256
    $region25: #{_perceptual_vae_loss_impl.1} parent=1 // pred_fallthru
      _
    // Predicated region
    $region26: #{_perceptual_vae_loss_impl.1} parent=1 // pred_check
      _
    $region27: #{_perceptual_vae_loss_impl.1} parent=1 // pred_check_branch
      %43 = sbr.rel (0) target = $region29
    $region28: #{_perceptual_vae_loss_impl.1} parent=1 // pred_region
      %44 = dma.done [#allocation8], 256
    $region29: #{_perceptual_vae_loss_impl.1} parent=1 // pred_fallthru
      _
    %p45 = scmp.eq.s32.totalorder 0, 0
    // Predicated region
    $region30: #{_perceptual_vae_loss_impl.1} parent=1 // pred_check
      %p46 = pneg %p45
    $region31: #{_perceptual_vae_loss_impl.1} parent=1 // pred_check_branch
      %48 = sbr.rel (%p46) target = $region33
    $region32: #{_perceptual_vae_loss_impl.1} parent=1 // pred_region
      %49 = vst [vmem:[#allocation2] sm:$0xff] 0.0
      %50 = vst [vmem:[#allocation2 + $0x8] sm:$0xff] 0.0
      %51 = vst [vmem:[#allocation3] sm:$0xff] 0.0
      %52 = vst [vmem:[#allocation3 + $0x8] sm:$0xff] 0.0
    $region33: #{_perceptual_vae_loss_impl.1} parent=1 // pred_fallthru
      _
    %v53 = vld [vmem:[#allocation4] sm:$0xff]
    %v54 = vld [vmem:[#allocation4 + $0x8] sm:$0xff]
    %v55 = vld [vmem:[#allocation7] sm:$0xff]
    %v56 = vld [vmem:[#allocation7 + $0x8] sm:$0xff]
    %v57 = vsub.f32 %v53, %v55
    %v58 = vsub.f32 %v54, %v56
    %v59 = vmul.f32 %v57, %v57
    %v60 = vmul.f32 %v58, %v58
    %v61 = vand.u32 2147483647, %v53
    %v62 = vand.u32 2147483647, %v54
    %v63 = vadd.f32 %v61, 1e-08
    %v64 = vadd.f32 %v62, 1e-08
    %v65 = vrsqrt.pop %v63
    %v66 = vmul.f32 %v63, %v65
    %vm67 = vcmp.eq.f32.partialorder %v63, inf
    %v68 = vsel %vm67, %v63, %v66
    %vm69 = vcmp.eq.f32.partialorder %v63, 0.0
    %v70 = vand.u32 %v63, 2147483648
    %v71 = vsel %vm69, %v70, %v68
    %v72 = vrsqrt.pop %v64
    %v73 = vmul.f32 %v64, %v72
    %vm74 = vcmp.eq.f32.partialorder %v64, inf
    %v75 = vsel %vm74, %v64, %v73
    %vm76 = vcmp.eq.f32.partialorder %v64, 0.0
    %v77 = vand.u32 %v64, 2147483648
    %v78 = vsel %vm76, %v77, %v75
    %v79 = vld [vmem:[#allocation2] sm:$0xff]
    %v80 = vld [vmem:[#allocation2 + $0x8] sm:$0xff]
    %v81 = vadd.f32 %v79, %v59
    %v82 = vadd.f32 %v80, %v60
    %83 = vst [vmem:[#allocation2] sm:$0xff] %v81
    %84 = vst [vmem:[#allocation2 + $0x8] sm:$0xff] %v82
    %v85 = vld [vmem:[#allocation3] sm:$0xff]
    %v86 = vld [vmem:[#allocation3 + $0x8] sm:$0xff]
    %v87 = vmul.f32 %v71, %v59
    %v88 = vmul.f32 %v78, %v60
    %v89 = vadd.f32 %v85, %v87
    %v90 = vadd.f32 %v86, %v88
    %91 = vst [vmem:[#allocation3] sm:$0xff] %v89
    %92 = vst [vmem:[#allocation3 + $0x8] sm:$0xff] %v90
    // Predicated region
    $region34: #{_perceptual_vae_loss_impl.1} parent=1 // pred_check
      %p93 = pneg %p45
    $region35: #{_perceptual_vae_loss_impl.1} parent=1 // pred_check_branch
      %95 = sbr.rel (%p93) target = $region37
    $region36: #{_perceptual_vae_loss_impl.1} parent=1 // pred_region
      %v96 = vld [vmem:[#allocation2] sm:$0xff]
      %v97 = vld [vmem:[#allocation2 + $0x8] sm:$0xff]
      %v100 = vcombine.high %v96, %v96
      %v102 = vunpack.c.l.s4 1983009808
      %v103 = vunpack.c.0.s8 %v102
      %v104 = vlaneseq
      %v105 = vshrl.u32 %v104, 7
      %v106 = vsub.s32 %v103, %v105
      %v107 = vrot.slane %v96, %v106
      %v109 = vunpack.c.l.s4 1983009808
      %v110 = vunpack.c.0.s8 %v109
      %v111 = vlaneseq
      %v112 = vshrl.u32 %v111, 7
      %v113 = vsub.s32 %v110, %v112
      %v114 = vrot.slane %v100, %v113
      %v115 = vcombine.high %v107, %v107
      %v116 = vcombine.high %v114, %v114
      %v117 = vcombine.high %v97, %v97
      %v119 = vunpack.c.l.s4 1983009808
      %v120 = vunpack.c.0.s8 %v119
      %v121 = vlaneseq
      %v122 = vshrl.u32 %v121, 7
      %v123 = vsub.s32 %v120, %v122
      %v124 = vrot.slane %v97, %v123
      %v126 = vunpack.c.l.s4 1983009808
      %v127 = vunpack.c.0.s8 %v126
      %v128 = vlaneseq
      %v129 = vshrl.u32 %v128, 7
      %v130 = vsub.s32 %v127, %v129
      %v131 = vrot.slane %v117, %v130
      %v132 = vcombine.high %v124, %v124
      %v133 = vcombine.high %v131, %v131
      %vm142 = vcmask 1041408
      %v143 = vsel %vm142, %v107, 0.0
      %v144 = vsel %vm142, %v115, 0.0
      %v145 = vadd.f32 %v143, %v144
      %v146 = vsel %vm142, %v114, 0.0
      %v147 = vadd.f32 %v145, %v146
      %v148 = vsel %vm142, %v116, 0.0
      %v149 = vadd.f32 %v147, %v148
      %v150 = vsel %vm142, %v124, 0.0
      %v151 = vadd.f32 %v149, %v150
      %v152 = vsel %vm142, %v132, 0.0
      %v153 = vadd.f32 %v151, %v152
      %v154 = vsel %vm142, %v131, 0.0
      %v155 = vadd.f32 %v153, %v154
      %v156 = vsel %vm142, %v133, 0.0
      %v157 = vadd.f32 %v155, %v156
      %158 = vadd.xlane.f32.xlu0 %v157
      %v159 = vpop.xlane.xlu0 %158
      %v160 = vrot.slane %v159, 4
      %v161 = vadd.f32 %v159, %v160
      %v162 = vrot.slane %v161, 2
      %v163 = vadd.f32 %v161, %v162
      %v164 = vrot.slane %v163, 1
      %v165 = vadd.f32 %v163, %v164
      %s166 = vtos %v165
      %v167 = vrcp.pop 2048.0
      %s168 = vtos %v167
      %s169 = smul.f32 %s166, %s168
      %v170 = vld [vmem:[#allocation3] sm:$0xff]
      %v171 = vld [vmem:[#allocation3 + $0x8] sm:$0xff]
      %v174 = vcombine.high %v170, %v170
      %v176 = vunpack.c.l.s4 1983009808
      %v177 = vunpack.c.0.s8 %v176
      %v178 = vlaneseq
      %v179 = vshrl.u32 %v178, 7
      %v180 = vsub.s32 %v177, %v179
      %v181 = vrot.slane %v170, %v180
      %v183 = vunpack.c.l.s4 1983009808
      %v184 = vunpack.c.0.s8 %v183
      %v185 = vlaneseq
      %v186 = vshrl.u32 %v185, 7
      %v187 = vsub.s32 %v184, %v186
      %v188 = vrot.slane %v174, %v187
      %v189 = vcombine.high %v181, %v181
      %v190 = vcombine.high %v188, %v188
      %v191 = vcombine.high %v171, %v171
      %v193 = vunpack.c.l.s4 1983009808
      %v194 = vunpack.c.0.s8 %v193
      %v195 = vlaneseq
      %v196 = vshrl.u32 %v195, 7
      %v197 = vsub.s32 %v194, %v196
      %v198 = vrot.slane %v171, %v197
      %v200 = vunpack.c.l.s4 1983009808
      %v201 = vunpack.c.0.s8 %v200
      %v202 = vlaneseq
      %v203 = vshrl.u32 %v202, 7
      %v204 = vsub.s32 %v201, %v203
      %v205 = vrot.slane %v191, %v204
      %v206 = vcombine.high %v198, %v198
      %v207 = vcombine.high %v205, %v205
      %v216 = vsel %vm142, %v181, 0.0
      %v217 = vsel %vm142, %v189, 0.0
      %v218 = vadd.f32 %v216, %v217
      %v219 = vsel %vm142, %v188, 0.0
      %v220 = vadd.f32 %v218, %v219
      %v221 = vsel %vm142, %v190, 0.0
      %v222 = vadd.f32 %v220, %v221
      %v223 = vsel %vm142, %v198, 0.0
      %v224 = vadd.f32 %v222, %v223
      %v225 = vsel %vm142, %v206, 0.0
      %v226 = vadd.f32 %v224, %v225
      %v227 = vsel %vm142, %v205, 0.0
      %v228 = vadd.f32 %v226, %v227
      %v229 = vsel %vm142, %v207, 0.0
      %v230 = vadd.f32 %v228, %v229
      %231 = vadd.xlane.f32.xlu0 %v230
      %v232 = vpop.xlane.xlu0 %231
      %v233 = vrot.slane %v232, 4
      %v234 = vadd.f32 %v232, %v233
      %v235 = vrot.slane %v234, 2
      %v236 = vadd.f32 %v234, %v235
      %v237 = vrot.slane %v236, 1
      %v238 = vadd.f32 %v236, %v237
      %s239 = vtos %v238
      %v240 = vrcp.pop 2048.0
      %s241 = vtos %v240
      %s242 = smul.f32 %s239, %s241
      %v243 = vld [vmem:[%s3] sm:$0x3]
      %v244 = vld [vmem:[%s4] sm:$0x3]
      %v245 = vadd.f32 %v244, 1.0
      %v246 = vmul.f32 %v243, %v243
      %v247 = vsub.f32 %v245, %v246
      %v248 = vmul.f32 %v244, 1.442695
      %v249 = vpow.pop %v248
      %v250 = vsub.f32 %v247, %v249
      %vm251 = vcmask 254976
      %v252 = vsel %vm251, %v250, 0.0
      %253 = vadd.xlane.f32.xlu0 %v252
      %v254 = vpop.xlane.xlu0 %253
      %v255 = vrot.slane %v254, 4
      %v256 = vadd.f32 %v254, %v255
      %v257 = vrot.slane %v256, 2
      %v258 = vadd.f32 %v256, %v257
      %v259 = vrot.slane %v258, 1
      %v260 = vadd.f32 %v258, %v259
      %s261 = vtos %v260
      %s262 = smul.f32 %s261, -0.5
      %v263 = vrcp.pop 2.0
      %s264 = vtos %v263
      %s265 = smul.f32 %s262, %s264
      %v266 = vld [vmem:[%s2] sm:$0x3]
      %v267 = vand.u32 2147483647, %v266
      %v268 = vsel %vm251, %v267, 0.0
      %v269 = vrot.slane %v268, 4
      %v270 = vadd.f32 %v268, %v269
      %v271 = vrot.slane %v270, 2
      %v272 = vadd.f32 %v270, %v271
      %v273 = vrot.slane %v272, 1
      %v274 = vadd.f32 %v272, %v273
      %v275 = vrcp.pop 2.0
      %v276 = vmul.f32 %v274, %v275
      %v277 = vadd.f32 %v276, 1e-08
      %v278 = vrcp.pop %v277
      %v279 = vmul.f32 0.050000012, %v278
      %v280 = vlog2.pop %v279
      %v281 = vmul.f32 %v280, 0.6931472
      %v282 = vmul.f32 %v281, 0.05
      %v283 = vsub.f32 1.0, %v276
      %v284 = vadd.f32 %v283, 1e-08
      %v285 = vrcp.pop %v284
      %v286 = vmul.f32 0.95, %v285
      %v287 = vlog2.pop %v286
      %v288 = vmul.f32 %v287, 0.6931472
      %v289 = vmul.f32 %v288, 0.95
      %v290 = vadd.f32 %v282, %v289
      %vm291 = vcmask 253952
      %v292 = vsel %vm291, %v290, 0.0
      %293 = vadd.xlane.f32.xlu0 %v292
      %v294 = vpop.xlane.xlu0 %293
      %v295 = vrot.slane %v294, 4
      %v296 = vadd.f32 %v294, %v295
      %v297 = vrot.slane %v296, 2
      %v298 = vadd.f32 %v296, %v297
      %v299 = vrot.slane %v298, 1
      %v300 = vadd.f32 %v298, %v299
      %s301 = vtos %v300
      %s302 = smul.f32 %s242, 0.5
      %s303 = sadd.f32 %s169, %s302
      %s304 = smul.f32 %s265, 0.01
      %s305 = sadd.f32 %s303, %s304
      %s306 = smul.f32 %s301, 0.1
      %s307 = sadd.f32 %s305, %s306
      %s308 = sadd.f32 %s307, 0.0
      %s309 = sadd.f32 %s308, 0.0
      %s310 = scalar_lea.smem [#allocation9], 0
      %311 = sst [smem:[%s310]] %s309
      %s312 = scalar_lea.smem [#allocation9], 1
      %313 = sst [smem:[%s312]] %s169
      %s314 = scalar_lea.smem [#allocation9], 2
      %315 = sst [smem:[%s314]] %s242
      %s316 = scalar_lea.smem [#allocation9], 3
      %317 = sst [smem:[%s316]] %s265
      %s318 = scalar_lea.smem [#allocation9], 4
      %319 = sst [smem:[%s318]] %s301
      %s320 = scalar_lea.smem [#allocation9], 5
      %321 = sst [smem:[%s320]] 0.0
      %s322 = scalar_lea.smem [#allocation9], 6
      %323 = sst [smem:[%s322]] 0.0
      %s324 = scalar_lea.smem [#allocation9], 7
      %325 = sst [smem:[%s324]] 0.0
    $region37: #{_perceptual_vae_loss_impl.1} parent=1 // pred_fallthru
      _
    // Predicated region
    $region38: #{_perceptual_vae_loss_impl.1} parent=1 // pred_check
      _
    $region39: #{_perceptual_vae_loss_impl.1} parent=1 // pred_check_branch
      %327 = sbr.rel (0) target = $region41
    $region40: #{_perceptual_vae_loss_impl.1} parent=1 // pred_region
      %s329 = ssub.s32 16, 16
      %330 = vsyncadd [#allocation6], %s329
      %s332 = sshll.u32 %s5, 4
      %s333 = int_to_ptr.vmem [resolvable:$true] %s332
      %335 = dma.smem_to_vmem [#allocation9], 16, %s333, [#allocation6]
    $region41: #{_perceptual_vae_loss_impl.1} parent=1 // pred_fallthru
      _
    // Predicated region
    $region42: #{_perceptual_vae_loss_impl.1} parent=1 // pred_check
      _
    $region43: #{_perceptual_vae_loss_impl.1} parent=1 // pred_check_branch
      %337 = sbr.rel (0) target = $region45
    $region44: #{_perceptual_vae_loss_impl.1} parent=1 // pred_region
      %338 = dma.done [#allocation6], 16
    $region45: #{_perceptual_vae_loss_impl.1} parent=1 // pred_fallthru
      _
    %339 = sfence
    %340 = vsyncpa [#allocation5], 1
    %341 = vsyncpa [#allocation8], 1
    %342 = vsyncpa [#allocation6], 1

</llo_original>
